<compile_context>
chip_gen: v6e
topology: v6e:2x2x1
jax: 0.10.0
libtpu: 0.0.40
codegen_flags: <defaults>
</compile_context>

<pallas_src>
import jax
import jax.numpy as jnp
from jax.experimental import pallas as pl
from jax.experimental.pallas import tpu as pltpu


# --------------------------------------------------------------------------
# Kernels
# --------------------------------------------------------------------------

def _make_per_head_kernel(half):
    """Per-head layout kernel: blocks are (ts, H, D), D % 128 == 0."""

    def kernel(x_ref, cos_ref, sin_ref, o_ref):
        # x_ref  : (ts, H, D)  activations (batch squeezed by the BlockSpec)
        # cos_ref: (ts, 1, D)  f32, [cos,  cos]  (sign baked in)
        # sin_ref: (ts, 1, D)  f32, [sin, -sin]
        x = x_ref[...].astype(jnp.float32)
        # rotate_half == lane rotation by D/2 (direction-agnostic); XLU slot,
        # free w.r.t. the VALU.  Positive axis index (Mosaic rejects -1).
        x_rot = pltpu.roll(x, shift=half, axis=2)
        # (ts, 1, D) table operands broadcast over the head (sublane) axis.
        o_ref[...] = (x * cos_ref[...] + x_rot * sin_ref[...]).astype(o_ref.dtype)

    return kernel


def _make_merged_kernel(H, D, use_xlu_roll):
    """Lane-merged layout kernel: blocks are (ts, H*D).  Used when D or H is
    not (8,128)-tile aligned so loads/stores stay full-width and unmasked."""
    half = D // 2
    N = H * D

    def kernel(x_ref, cos_ref, sin_hi_ref, sin_lo_ref, o_ref):
        # x_ref      : (ts, H*D)
        # cos_ref    : (ts, D) f32  [cos, cos]
        # sin_hi_ref : (ts, D) f32  [sin, 0]
        # sin_lo_ref : (ts, D) f32  [0, -sin]
        x = x_ref[...].astype(jnp.float32)
        if use_xlu_roll:
            x_hi = pltpu.roll(x, shift=N - half, axis=1)   # x_hi[i] = x[i + half]
            x_lo = pltpu.roll(x, shift=half, axis=1)       # x_lo[i] = x[i - half]
        else:
            x_hi = jnp.concatenate([x[:, half:], x[:, :half]], axis=1)
            x_lo = jnp.concatenate([x[:, N - half:], x[:, :N - half]], axis=1)

        # Expand the D-wide tables across heads in-kernel (keeps HBM table
        # traffic at (S, D) rather than (S, H*D)); VMEM copies are cheap in an
        # HBM-bound kernel.  The zero halves of sin_hi / sin_lo also cancel
        # the cross-head (and block-edge) wraparound of the rolls above.
        def tile_heads(t):
            return jnp.concatenate([t] * H, axis=1) if H > 1 else t

        cos_t = tile_heads(cos_ref[...])
        sin_hi_t = tile_heads(sin_hi_ref[...])
        sin_lo_t = tile_heads(sin_lo_ref[...])
        o_ref[...] = (x * cos_t + x_hi * sin_hi_t + x_lo * sin_lo_t).astype(o_ref.dtype)

    return kernel


# --------------------------------------------------------------------------
# Tiling
# --------------------------------------------------------------------------

def _vmem_limit_bytes():
    """Scoped-VMEM limit derived from the actual chip (v7x has 64 MiB per TC,
    v5e/v6e 128 MiB), with headroom for compiler scratch."""
    cap = 64 * 1024 * 1024  # conservative default if the query is unavailable
    try:
        cap = int(pltpu.get_tpu_info().vmem_capacity_bytes)
    except Exception:
        pass
    return max(16 * 1024 * 1024, min(cap * 3 // 4, 96 * 1024 * 1024))


def _pick_seq_tile(S, B, bytes_per_row, vmem_limit):
    """Largest seq tile whose working set fits a fraction of the VMEM limit,
    while keeping enough grid steps for pipeline overlap / dual-TC sharding."""
    budget = int(vmem_limit * 0.6)
    ts = max(1, budget // max(bytes_per_row, 1))
    ts = min(ts, S, 2048)
    # Keep >= ~4 total grid steps: overlaps the writeback of tile i with the
    # input DMA of tile i+1 and lets v7x's two TensorCores share the seq axis
    # even when B == 1.
    min_steps = 4
    if B * pl.cdiv(S, ts) < min_steps:
        want_tiles = pl.cdiv(min_steps, B)
        cap = max(8, (pl.cdiv(S, want_tiles) // 8) * 8)
        if cap < S:
            ts = min(ts, cap)
    if ts < S:
        ts = max(8, (ts // 8) * 8)   # sublane-aligned step (BlockSpec-friendly)
    return ts


# --------------------------------------------------------------------------
# Wrapper
# --------------------------------------------------------------------------

def rope_forward(x, base=10000.0):
    """Applies RoPE to x of shape (B, S, H, D); matches the PyTorch module."""
    B, S, H, D = x.shape
    assert D % 2 == 0, "head_dim must be even"
    half = D // 2

    # Table setup (plain JAX glue; identical math to the torch module).
    inv_freq = 1.0 / (base ** (jnp.arange(0, D, 2, dtype=jnp.float32) / D))
    angles = jnp.outer(jnp.arange(S, dtype=jnp.float32), inv_freq)  # (S, half)
    cos = jnp.cos(angles)
    sin = jnp.sin(angles)

    vmem_limit = _vmem_limit_bytes()
    itemsize = jnp.dtype(x.dtype).itemsize
    cparams = pltpu.CompilerParams(
        dimension_semantics=("parallel", "parallel"),
        vmem_limit_bytes=vmem_limit,
    )

    per_head = (D % 128 == 0) and (H % 8 == 0)

    if per_head:
        # (ts, H, D) blocks are already lane/sublane dense.
        cos_full = jnp.concatenate([cos, cos], axis=-1)[:, None, :]      # (S,1,D)
        sin_signed = jnp.concatenate([sin, -sin], axis=-1)[:, None, :]   # (S,1,D)
        # Per seq row: double-buffered x in/out, double-buffered tables (their
        # unit sublane dim pads to 8), plus ~5 f32 in-kernel temporaries.
        bytes_per_row = 4 * H * D * itemsize + 2 * 2 * 8 * D * 4 + 5 * H * D * 4
        ts = _pick_seq_tile(S, B, bytes_per_row, vmem_limit)
        grid = (pl.cdiv(S, ts), B)   # batch innermost: table tiles reused, not re-DMA'd
        return pl.pallas_call(
            _make_per_head_kernel(half),
            out_shape=jax.ShapeDtypeStruct((B, S, H, D), x.dtype),
            grid_spec=pltpu.PrefetchScalarGridSpec(
                num_scalar_prefetch=0,
                grid=grid,
                in_specs=[
                    pl.BlockSpec((None, ts, H, D), lambda s, b: (b, s, 0, 0)),
                    pl.BlockSpec((ts, 1, D), lambda s, b: (s, 0, 0)),
                    pl.BlockSpec((ts, 1, D), lambda s, b: (s, 0, 0)),
                ],
                out_specs=pl.BlockSpec((None, ts, H, D), lambda s, b: (b, s, 0, 0)),
            ),
            compiler_params=cparams,
        )(x, cos_full, sin_signed)

    # Merged lane-dense path (D < 128 / unaligned, or small H e.g. GQA KV).
    N = H * D
    zeros = jnp.zeros_like(sin)
    cos_full = jnp.concatenate([cos, cos], axis=-1)      # (S, D)  [cos, cos]
    sin_hi = jnp.concatenate([sin, zeros], axis=-1)      # (S, D)  [sin, 0]
    sin_lo = jnp.concatenate([zeros, -sin], axis=-1)     # (S, D)  [0, -sin]

    d_pad = ((D + 127) // 128) * 128
    # Per seq row: double-buffered x in/out, 3 double-buffered lane-padded f32
    # tables, plus ~6 f32 in-kernel temporaries (upcast, 2 rolls, 3 tiled tables).
    bytes_per_row = 4 * N * itemsize + 2 * 3 * d_pad * 4 + 6 * N * 4
    ts = _pick_seq_tile(S, B, bytes_per_row, vmem_limit)
    grid = (pl.cdiv(S, ts), B)       # batch innermost: table tiles reused

    x_m = x.reshape(B, S, N)         # free: merges the contiguous trailing axes
    out = pl.pallas_call(
        _make_merged_kernel(H, D, use_xlu_roll=(N % 128 == 0)),
        out_shape=jax.ShapeDtypeStruct((B, S, N), x.dtype),
        grid_spec=pltpu.PrefetchScalarGridSpec(
            num_scalar_prefetch=0,
            grid=grid,
            in_specs=[
                pl.BlockSpec((None, ts, N), lambda s, b: (b, s, 0)),
                pl.BlockSpec((ts, D), lambda s, b: (s, 0)),
                pl.BlockSpec((ts, D), lambda s, b: (s, 0)),
                pl.BlockSpec((ts, D), lambda s, b: (s, 0)),
            ],
            out_specs=pl.BlockSpec((None, ts, N), lambda s, b: (b, s, 0)),
        ),
        compiler_params=cparams,
    )(x_m, cos_full, sin_hi, sin_lo)
    return out.reshape(B, S, H, D)


# --------------------------------------------------------------------------
# Pure-JAX reference (mirrors the PyTorch forward)
# --------------------------------------------------------------------------

def rope_reference(x, base=10000.0):
    B, S, H, D = x.shape
    half = D // 2
    inv_freq = 1.0 / (base ** (jnp.arange(0, D, 2, dtype=jnp.float32) / D))
    angles = jnp.outer(jnp.arange(S, dtype=jnp.float32), inv_freq)
    cos = jnp.cos(angles)[None, :, None, :]
    sin = jnp.sin(angles)[None, :, None, :]
    x1 = x[..., :half]
    x2 = x[..., half:]
    y1 = x1 * cos + x2 * sin
    y2 = x2 * cos - x1 * sin
    return jnp.concatenate([y1, y2], axis=-1).astype(x.dtype)


if __name__ == "__main__":
    # 1) Merged lane-dense path with the XLU roll: H < 8, H*D % 128 == 0.
    B, S, H, D = 2, 16, 4, 128
    x = jax.random.normal(jax.random.PRNGKey(0), (B, S, H, D), dtype=jnp.float32)
    out = jax.block_until_ready(rope_forward(x))
    assert out.shape == (B, S, H, D)
    assert jnp.allclose(out, rope_reference(x), atol=1e-5, rtol=1e-5)

    # 2) Small head_dim (D = 32): merged path with sub-lane-width tables.
    x2 = jax.random.normal(jax.random.PRNGKey(1), (2, 16, 4, 32), dtype=jnp.float32)
    out2 = jax.block_until_ready(rope_forward(x2))
    assert jnp.allclose(out2, rope_reference(x2), atol=1e-5, rtol=1e-5)

    # 3) Per-head path (D % 128 == 0, H % 8 == 0) with B == 1 and a ragged
    #    last seq tile (S = 36, ts = 8): exercises partial-block handling and
    #    the min-grid-steps split.
    x3 = jax.random.normal(jax.random.PRNGKey(2), (1, 36, 8, 128), dtype=jnp.float32)
    out3 = jax.block_until_ready(rope_forward(x3))
    assert jnp.allclose(out3, rope_reference(x3), atol=1e-5, rtol=1e-5)

    # 4) bf16 activations: f32 tables and math, single cast at the store.
    x4 = jax.random.normal(jax.random.PRNGKey(3), (2, 16, 4, 64), dtype=jnp.bfloat16)
    out4 = jax.block_until_ready(rope_forward(x4))
    ref4 = rope_reference(x4)
    assert jnp.allclose(out4.astype(jnp.float32), ref4.astype(jnp.float32),
                        atol=1e-2, rtol=1e-2)

    print("KERNEL_OK")
</pallas_src>

<mosaic_0001>
module attributes {stable_mosaic.version = 11 : i64} {
  func.func @kernel(%arg0: i32, %arg1: i32, %arg2: memref<1x8x512xf32, #tpu.memory_space<vmem>>, %arg3: memref<8x128xf32, #tpu.memory_space<vmem>>, %arg4: memref<8x128xf32, #tpu.memory_space<vmem>>, %arg5: memref<8x128xf32, #tpu.memory_space<vmem>>, %arg6: memref<1x8x512xf32, #tpu.memory_space<vmem>>) attributes {dimension_semantics = [#tpu.dimension_semantics<parallel>, #tpu.dimension_semantics<parallel>], iteration_bounds = array<i64: 2, 2>, scalar_prefetch = 0 : i64, scratch_operands = 0 : i64, tpu.core_type = #tpu.core_type<tc>, window_params = [{transform_indices = @transform_0, window_bounds = array<i64: 1, 8, 512>}, {transform_indices = @transform_1, window_bounds = array<i64: 8, 128>}, {transform_indices = @transform_2, window_bounds = array<i64: 8, 128>}, {transform_indices = @transform_3, window_bounds = array<i64: 8, 128>}, {transform_indices = @transform_4, window_bounds = array<i64: 1, 8, 512>}]} {
    %c0 = arith.constant 0 : index
    %c0_0 = arith.constant 0 : index
    %c0_1 = arith.constant 0 : index
    %0 = vector.load %arg2[%c0, %c0_0, %c0_1] : memref<1x8x512xf32, #tpu.memory_space<vmem>>, vector<1x8x512xf32>
    %1 = vector.shape_cast %0 : vector<1x8x512xf32> to vector<8x512xf32>
    %c448_i32 = arith.constant 448 : i32
    %2 = tpu.dynamic_rotate %1 by %c448_i32 dim 1 : vector<8x512xf32>, i32 -> vector<8x512xf32>
    %c64_i32 = arith.constant 64 : i32
    %3 = tpu.dynamic_rotate %1 by %c64_i32 dim 1 : vector<8x512xf32>, i32 -> vector<8x512xf32>
    %c0_2 = arith.constant 0 : index
    %c0_3 = arith.constant 0 : index
    %4 = vector.load %arg3[%c0_2, %c0_3] : memref<8x128xf32, #tpu.memory_space<vmem>>, vector<8x128xf32>
    %5 = tpu.concatenate %4, %4, %4, %4 in 1 : vector<8x128xf32>, vector<8x128xf32>, vector<8x128xf32>, vector<8x128xf32> -> vector<8x512xf32>
    %c0_4 = arith.constant 0 : index
    %c0_5 = arith.constant 0 : index
    %6 = vector.load %arg4[%c0_4, %c0_5] : memref<8x128xf32, #tpu.memory_space<vmem>>, vector<8x128xf32>
    %7 = tpu.concatenate %6, %6, %6, %6 in 1 : vector<8x128xf32>, vector<8x128xf32>, vector<8x128xf32>, vector<8x128xf32> -> vector<8x512xf32>
    %c0_6 = arith.constant 0 : index
    %c0_7 = arith.constant 0 : index
    %8 = vector.load %arg5[%c0_6, %c0_7] : memref<8x128xf32, #tpu.memory_space<vmem>>, vector<8x128xf32>
    %9 = tpu.concatenate %8, %8, %8, %8 in 1 : vector<8x128xf32>, vector<8x128xf32>, vector<8x128xf32>, vector<8x128xf32> -> vector<8x512xf32>
    %10 = arith.mulf %1, %5 : vector<8x512xf32>
    %11 = arith.mulf %2, %7 : vector<8x512xf32>
    %12 = arith.addf %10, %11 : vector<8x512xf32>
    %13 = arith.mulf %3, %9 : vector<8x512xf32>
    %14 = arith.addf %12, %13 : vector<8x512xf32>
    %c0_8 = arith.constant 0 : index
    %c0_9 = arith.constant 0 : index
    %c0_10 = arith.constant 0 : index
    %15 = vector.load %arg6[%c0_8, %c0_9, %c0_10] : memref<1x8x512xf32, #tpu.memory_space<vmem>>, vector<1x8x512xf32>
    %16 = vector.shape_cast %15 : vector<1x8x512xf32> to vector<8x512xf32>
    %17 = vector.shape_cast %14 : vector<8x512xf32> to vector<1x8x512xf32>
    tpu.vector_store %arg6[%c0_8, %c0_9, %c0_10], %17 {strides = array<i32>} : memref<1x8x512xf32, #tpu.memory_space<vmem>>, vector<1x8x512xf32>,
    return
  }
  func.func @transform_0(%arg0: i32, %arg1: i32) -> (i32, i32, i32) {
    %c0_i32 = arith.constant 0 : i32
    %c0_i32_0 = arith.constant 0 : i32
    return %arg1, %arg0, %c0_i32 : i32, i32, i32
  }
  func.func @transform_1(%arg0: i32, %arg1: i32) -> (i32, i32) {
    %c0_i32 = arith.constant 0 : i32
    %c0_i32_0 = arith.constant 0 : i32
    return %arg0, %c0_i32 : i32, i32
  }
  func.func @transform_2(%arg0: i32, %arg1: i32) -> (i32, i32) {
    %c0_i32 = arith.constant 0 : i32
    %c0_i32_0 = arith.constant 0 : i32
    return %arg0, %c0_i32 : i32, i32
  }
  func.func @transform_3(%arg0: i32, %arg1: i32) -> (i32, i32) {
    %c0_i32 = arith.constant 0 : i32
    %c0_i32_0 = arith.constant 0 : i32
    return %arg0, %c0_i32 : i32, i32
  }
  func.func @transform_4(%arg0: i32, %arg1: i32) -> (i32, i32, i32) {
    %c0_i32 = arith.constant 0 : i32
    %c0_i32_0 = arith.constant 0 : i32
    return %arg1, %arg0, %c0_i32 : i32, i32, i32
  }
}

</mosaic_0001>

<llo_original>
// kernel: tpu_custom_call.1
$region0: #{tpu_custom_call.1}
  #allocation0 [shape = 'u32[]', space=smem, size = 0x4, offset = 0x4, fixed_abs, tag = 'smem constant byte address 0x4 - core index']
  #allocation1 [shape = 'u32[144,128]{1,0:T(1,128)}', space=vmem, size = 0x12000, scoped, tag = 'internal scratch']
  %s0 = inlined_call_operand.hbm [shape: f32[2,16,512], index: 0, kind: input, shape index: {}]
  %s1 = inlined_call_operand.hbm [shape: f32[16,128], index: 1, kind: input, shape index: {}]
  %s2 = inlined_call_operand.hbm [shape: f32[16,128], index: 2, kind: input, shape index: {}]
  %s3 = inlined_call_operand.hbm [shape: f32[16,128], index: 3, kind: input, shape index: {}]
  %s4 = inlined_call_operand.hbm [shape: f32[2,16,512], index: 4, kind: output, shape index: {}]
  %s5 = sld [smem:[#allocation0]]
  $region65: #{tpu_custom_call.1} parent=0
    _
  %s7 = ssub.s32 1, %s5
  %s8 = scalar_select 0, %s7, %s5
  $region1: #{tpu_custom_call.1} parent=0
    #allocation2 [shape = 'u8[32768]{0}', space=vmem, size = 0x8000, scoped, tag = 'input window, operand 0']
    #allocation3 [shape = 's32[2]{0}', space=sflag, size = 0x8, scoped, tag = 'scoped memory for tpu_custom_call.1']
    #allocation4 [shape = 's32[2]{0}', space=sflag, size = 0x8, scoped, tag = 'scoped memory for tpu_custom_call.1']
    #allocation5 [shape = 'u8[8192]{0}', space=vmem, size = 0x2000, scoped, tag = 'input window, operand 1']
    #allocation6 [shape = 's32[2]{0}', space=sflag, size = 0x8, scoped, tag = 'scoped memory for tpu_custom_call.1']
    #allocation7 [shape = 'u8[8192]{0}', space=vmem, size = 0x2000, scoped, tag = 'input window, operand 2']
    #allocation8 [shape = 'u8[8192]{0}', space=vmem, size = 0x2000, scoped, tag = 'input window, operand 3']
    #allocation9 [shape = 's32[2]{0}', space=sflag, size = 0x8, scoped, tag = 'scoped memory for tpu_custom_call.1']
    #allocation10 [shape = 'u8[32768]{0}', space=vmem, size = 0x8000, scoped, tag = 'output window, operand 0']
    %9 = vsyncpa [#allocation3], 0
    %s10 = scalar_lea.sflag [#allocation3], 1
    %11 = vsyncpa %s10, 0
    %12 = vsyncpa [#allocation6], 0
    %s13 = scalar_lea.sflag [#allocation6], 1
    %14 = vsyncpa %s13, 0
    %15 = vsyncpa [#allocation9], 0
    %s16 = scalar_lea.sflag [#allocation9], 1
    %17 = vsyncpa %s16, 0
    %18 = vsyncpa [#allocation4], 0
    %s19 = scalar_lea.sflag [#allocation4], 1
    %20 = vsyncpa %s19, 0
    loop: start=0, step=1, limit=6
    $region2: #{tpu_custom_call.1} parent=1 // loop_pre_header
      _
    $region3: #{tpu_custom_call.1} parent=1 // loop_header
      %s22 = sphi 0, %s26
      %p23 = scmp.ge.s32.totalorder %s22, 6
      %s29 = sphi 0, %s41
      %s30 = sphi 0, %s37
      %s31 = sphi 0, %s29
      %s32 = sphi 0, %s30
      %s33 = sphi 0, %s31
      %s34 = sphi 0, %s32
      %s46 = sphi 0, %s48
      %s49 = sphi 0, %s46
      %s50 = sphi 0, %s49
      %s66 = sphi 0, %s50
      %s72 = sphi 0, %s74
      %s75 = sphi 0, %s72
      %s76 = sphi 0, %s75
      %s92 = sphi 0, %s76
      %s98 = sphi 0, %s100
      %s101 = sphi 0, %s98
      %s102 = sphi 0, %s101
      %s118 = sphi 0, %s102
      %s124 = sphi 0, %s126
      %s127 = sphi 0, %s124
      %s128 = sphi 0, %s127
      %s144 = sphi 0, %s128
      %s152 = sphi 0, %s154
      %s155 = sphi 0, %s152
      %s156 = sphi 0, %s155
      %s172 = sphi 0, %s156
    $region4: #{tpu_custom_call.1} parent=1 // loop_header_branch
      %25 = sbr.rel (%p23) target = $region8
    $region5: #{tpu_custom_call.1} parent=1 // loop_body
      %s27 = ssub.s32 %s22, 1
      %s28 = ssub.s32 %s22, 2
      %s35 = sadd.s32 1, %s30
      %p36 = scmp.ge.s32.totalorder %s35, 2
      %s37 = scalar_select %p36, 0, %s35
      %s38 = sadd.s32 1, %s29
      %s39 = scalar_select %p36, %s38, %s29
      %p40 = scmp.ge.s32.totalorder %s39, 2
      %s41 = scalar_select %p40, 0, %s39
      %s42 = ssub.s32 %s30, %s37
      %s43 = ssub.s32 %s29, %s41
      %s44 = sor.u32 %s42, %s43
      %p45 = scmp.eq.s32.totalorder %s44, 0
      %s47 = sadd.s32 %s46, 1
      %s48 = scalar_select %p45, %s46, %s47
      %p51 = pneg %p45
      %p52 = scmp.eq.s32.totalorder %s22, 3
      %p53 = por %p51, %p52
      %p54 = scmp.ne.s32.totalorder %s46, %s49
      %p55 = scmp.eq.s32.totalorder %s22, 0
      %p56 = por %p54, %p55
      %p57 = scmp.ne.s32.totalorder %s46, %s49
      %p58 = scmp.eq.s32.totalorder %s27, 3
      %p59 = por %p57, %p58
      %p60 = scmp.ne.s32.totalorder %s49, %s50
      %p61 = scmp.eq.s32.totalorder %s27, 0
      %p62 = por %p60, %p61
      %p63 = scmp.ne.s32.totalorder %s49, %s50
      %p64 = scmp.eq.s32.totalorder %s28, 3
      %p65 = por %p63, %p64
      %p67 = scmp.ne.s32.totalorder %s50, %s66
      %p68 = scmp.eq.s32.totalorder %s28, 0
      %p69 = por %p67, %p68
      %s70 = ssub.s32 %s29, %s41
      %p71 = scmp.eq.s32.totalorder %s70, 0
      %s73 = sadd.s32 %s72, 1
      %s74 = scalar_select %p71, %s72, %s73
      %p77 = pneg %p71
      %p78 = scmp.eq.s32.totalorder %s22, 3
      %p79 = por %p77, %p78
      %p80 = scmp.ne.s32.totalorder %s72, %s75
      %p81 = scmp.eq.s32.totalorder %s22, 0
      %p82 = por %p80, %p81
      %p83 = scmp.ne.s32.totalorder %s72, %s75
      %p84 = scmp.eq.s32.totalorder %s27, 3
      %p85 = por %p83, %p84
      %p86 = scmp.ne.s32.totalorder %s75, %s76
      %p87 = scmp.eq.s32.totalorder %s27, 0
      %p88 = por %p86, %p87
      %p89 = scmp.ne.s32.totalorder %s75, %s76
      %p90 = scmp.eq.s32.totalorder %s28, 3
      %p91 = por %p89, %p90
      %p93 = scmp.ne.s32.totalorder %s76, %s92
      %p94 = scmp.eq.s32.totalorder %s28, 0
      %p95 = por %p93, %p94
      %s96 = ssub.s32 %s29, %s41
      %p97 = scmp.eq.s32.totalorder %s96, 0
      %s99 = sadd.s32 %s98, 1
      %s100 = scalar_select %p97, %s98, %s99
      %p103 = pneg %p97
      %p104 = scmp.eq.s32.totalorder %s22, 3
      %p105 = por %p103, %p104
      %p106 = scmp.ne.s32.totalorder %s98, %s101
      %p107 = scmp.eq.s32.totalorder %s22, 0
      %p108 = por %p106, %p107
      %p109 = scmp.ne.s32.totalorder %s98, %s101
      %p110 = scmp.eq.s32.totalorder %s27, 3
      %p111 = por %p109, %p110
      %p112 = scmp.ne.s32.totalorder %s101, %s102
      %p113 = scmp.eq.s32.totalorder %s27, 0
      %p114 = por %p112, %p113
      %p115 = scmp.ne.s32.totalorder %s101, %s102
      %p116 = scmp.eq.s32.totalorder %s28, 3
      %p117 = por %p115, %p116
      %p119 = scmp.ne.s32.totalorder %s102, %s118
      %p120 = scmp.eq.s32.totalorder %s28, 0
      %p121 = por %p119, %p120
      %s122 = ssub.s32 %s29, %s41
      %p123 = scmp.eq.s32.totalorder %s122, 0
      %s125 = sadd.s32 %s124, 1
      %s126 = scalar_select %p123, %s124, %s125
      %p129 = pneg %p123
      %p130 = scmp.eq.s32.totalorder %s22, 3
      %p131 = por %p129, %p130
      %p132 = scmp.ne.s32.totalorder %s124, %s127
      %p133 = scmp.eq.s32.totalorder %s22, 0
      %p134 = por %p132, %p133
      %p135 = scmp.ne.s32.totalorder %s124, %s127
      %p136 = scmp.eq.s32.totalorder %s27, 3
      %p137 = por %p135, %p136
      %p138 = scmp.ne.s32.totalorder %s127, %s128
      %p139 = scmp.eq.s32.totalorder %s27, 0
      %p140 = por %p138, %p139
      %p141 = scmp.ne.s32.totalorder %s127, %s128
      %p142 = scmp.eq.s32.totalorder %s28, 3
      %p143 = por %p141, %p142
      %p145 = scmp.ne.s32.totalorder %s128, %s144
      %p146 = scmp.eq.s32.totalorder %s28, 0
      %p147 = por %p145, %p146
      %s148 = ssub.s32 %s30, %s37
      %s149 = ssub.s32 %s29, %s41
      %s150 = sor.u32 %s148, %s149
      %p151 = scmp.eq.s32.totalorder %s150, 0
      %s153 = sadd.s32 %s152, 1
      %s154 = scalar_select %p151, %s152, %s153
      %p157 = pneg %p151
      %p158 = scmp.eq.s32.totalorder %s22, 3
      %p159 = por %p157, %p158
      %p160 = scmp.ne.s32.totalorder %s152, %s155
      %p161 = scmp.eq.s32.totalorder %s22, 0
      %p162 = por %p160, %p161
      %p163 = scmp.ne.s32.totalorder %s152, %s155
      %p164 = scmp.eq.s32.totalorder %s27, 3
      %p165 = por %p163, %p164
      %p166 = scmp.ne.s32.totalorder %s155, %s156
      %p167 = scmp.eq.s32.totalorder %s27, 0
      %p168 = por %p166, %p167
      %p169 = scmp.ne.s32.totalorder %s155, %s156
      %p170 = scmp.eq.s32.totalorder %s28, 3
      %p171 = por %p169, %p170
      %p173 = scmp.ne.s32.totalorder %s156, %s172
      %p174 = scmp.eq.s32.totalorder %s28, 0
      %p175 = por %p173, %p174
      %p176 = scmp.le.s32.totalorder 1, %s22
      %p177 = scmp.lt.s32.totalorder %s22, 5
      %p178 = pnand %p176, %p177
      %p179 = pneg %p178
      // Predicated region
      $region9: #{tpu_custom_call.1} parent=5 // pred_check
        _
      $region10: #{tpu_custom_call.1} parent=5 // pred_check_branch
        %181 = sbr.rel (%p178) target = $region12
      $region11: #{tpu_custom_call.1} parent=5 // pred_region
        %s182 = ssub.s32 %s22, 1
      $region12: #{tpu_custom_call.1} parent=5 // pred_fallthru
        _
      %p183 = scmp.lt.s32.totalorder %s22, 4
      // Predicated region
      $region13: #{tpu_custom_call.1} parent=5 // pred_check
        %p184 = pneg %p183
      $region14: #{tpu_custom_call.1} parent=5 // pred_check_branch
        %186 = sbr.rel (%p184) target = $region16
      $region15: #{tpu_custom_call.1} parent=5 // pred_region
        // Predicated region
        $region17: #{tpu_custom_call.1} parent=15 // pred_check
          %p187 = pneg %p56
        $region18: #{tpu_custom_call.1} parent=15 // pred_check_branch
          %189 = sbr.rel (%p187) target = $region20
        $region19: #{tpu_custom_call.1} parent=15 // pred_region
          %s190 = sand.u32 %s46, 1
          %s191 = scalar_lea.sflag [#allocation3], %s190
          %s192 = sand.u32 %s46, 1
          %s193 = smul.addr %s192, 32
          %s194 = scalar_lea.vmem [#allocation2], %s193
          %s196 = ssub.s32 512, 512
          %197 = vsyncadd %s191, %s196
          %s198 = smul.addr %s29, 4
          %s199 = smul.addr %s30, 8
          %s200 = sadd.s32 %s198, %s199
          %s201 = smul.addr %s200, 128
          %s202 = scalar_lea.hbm %s0, %s201
          %s204 = sshll.u32 %s194, 4
          %s205 = int_to_ptr.vmem [resolvable:$true] %s204
          %207 = dma.hbm_to_vmem [thread:$0]  %s202, 512, %s205, %s191
        $region20: #{tpu_custom_call.1} parent=15 // pred_fallthru
          _
        // Predicated region
        $region21: #{tpu_custom_call.1} parent=15 // pred_check
          %p208 = pneg %p82
        $region22: #{tpu_custom_call.1} parent=15 // pred_check_branch
          %210 = sbr.rel (%p208) target = $region24
        $region23: #{tpu_custom_call.1} parent=15 // pred_region
          %s211 = sand.u32 %s22, 1
          %s212 = scalar_lea.sflag [#allocation6], %s211
          %s213 = sand.u32 %s72, 1
          %s214 = smul.addr %s213, 8
          %s215 = scalar_lea.vmem [#allocation5], %s214
          %s217 = ssub.s32 128, 128
          %218 = vsyncadd %s212, %s217
          %s219 = smul.addr %s29, 128
          %s220 = scalar_lea.hbm %s1, %s219
          %s222 = sshll.u32 %s215, 4
          %s223 = int_to_ptr.vmem [resolvable:$true] %s222
          %225 = dma.hbm_to_vmem [thread:$0]  %s220, 128, %s223, %s212
        $region24: #{tpu_custom_call.1} parent=15 // pred_fallthru
          _
        // Predicated region
        $region25: #{tpu_custom_call.1} parent=15 // pred_check
          %p226 = pneg %p108
        $region26: #{tpu_custom_call.1} parent=15 // pred_check_branch
          %228 = sbr.rel (%p226) target = $region28
        $region27: #{tpu_custom_call.1} parent=15 // pred_region
          %s229 = sand.u32 %s22, 1
          %s230 = scalar_lea.sflag [#allocation6], %s229
          %s231 = sand.u32 %s98, 1
          %s232 = smul.addr %s231, 8
          %s233 = scalar_lea.vmem [#allocation7], %s232
          %s235 = ssub.s32 128, 128
          %236 = vsyncadd %s230, %s235
          %s237 = smul.addr %s29, 128
          %s238 = scalar_lea.hbm %s2, %s237
          %s240 = sshll.u32 %s233, 4
          %s241 = int_to_ptr.vmem [resolvable:$true] %s240
          %243 = dma.hbm_to_vmem [thread:$0]  %s238, 128, %s241, %s230
        $region28: #{tpu_custom_call.1} parent=15 // pred_fallthru
          _
        // Predicated region
        $region29: #{tpu_custom_call.1} parent=15 // pred_check
          %p244 = pneg %p134
        $region30: #{tpu_custom_call.1} parent=15 // pred_check_branch
          %246 = sbr.rel (%p244) target = $region32
        $region31: #{tpu_custom_call.1} parent=15 // pred_region
          %s247 = sand.u32 %s124, 1
          %s248 = scalar_lea.sflag [#allocation9], %s247
          %s249 = sand.u32 %s124, 1
          %s250 = smul.addr %s249, 8
          %s251 = scalar_lea.vmem [#allocation8], %s250
          %s253 = ssub.s32 128, 128
          %254 = vsyncadd %s248, %s253
          %s255 = smul.addr %s29, 128
          %s256 = scalar_lea.hbm %s3, %s255
          %s258 = sshll.u32 %s251, 4
          %s259 = int_to_ptr.vmem [resolvable:$true] %s258
          %261 = dma.hbm_to_vmem [thread:$0]  %s256, 128, %s259, %s248
        $region32: #{tpu_custom_call.1} parent=15 // pred_fallthru
          _
      $region16: #{tpu_custom_call.1} parent=5 // pred_fallthru
        _
      %p262 = scmp.le.s32.totalorder 1, %s22
      %p263 = scmp.lt.s32.totalorder %s22, 5
      %p264 = pnand %p262, %p263
      %p265 = pneg %p264
      // Predicated region
      $region33: #{tpu_custom_call.1} parent=5 // pred_check
        _
      $region34: #{tpu_custom_call.1} parent=5 // pred_check_branch
        %267 = sbr.rel (%p264) target = $region36
      $region35: #{tpu_custom_call.1} parent=5 // pred_region
        %s268 = ssub.s32 %s22, 1
        %s269 = sand.u32 %s49, 1
        %s270 = scalar_lea.sflag [#allocation3], %s269
        %s271 = sand.u32 %s49, 1
        %s272 = smul.addr %s271, 32
        %s273 = scalar_lea.vmem [#allocation2], %s272
        // Predicated region
        $region37: #{tpu_custom_call.1} parent=35 // pred_check
          %p274 = pneg %p62
        $region38: #{tpu_custom_call.1} parent=35 // pred_check_branch
          %276 = sbr.rel (%p274) target = $region40
        $region39: #{tpu_custom_call.1} parent=35 // pred_region
          %277 = dma.done %s270, 512
        $region40: #{tpu_custom_call.1} parent=35 // pred_fallthru
          _
        %s278 = sand.u32 %s27, 1
        %s279 = scalar_lea.sflag [#allocation6], %s278
        %s280 = sand.u32 %s75, 1
        %s281 = smul.addr %s280, 8
        %s282 = scalar_lea.vmem [#allocation5], %s281
        // Predicated region
        $region41: #{tpu_custom_call.1} parent=35 // pred_check
          %p283 = pneg %p88
        $region42: #{tpu_custom_call.1} parent=35 // pred_check_branch
          %285 = sbr.rel (%p283) target = $region44
        $region43: #{tpu_custom_call.1} parent=35 // pred_region
          %286 = dma.done %s279, 128
        $region44: #{tpu_custom_call.1} parent=35 // pred_fallthru
          _
        %s287 = sand.u32 %s27, 1
        %s288 = scalar_lea.sflag [#allocation6], %s287
        %s289 = sand.u32 %s101, 1
        %s290 = smul.addr %s289, 8
        %s291 = scalar_lea.vmem [#allocation7], %s290
        // Predicated region
        $region45: #{tpu_custom_call.1} parent=35 // pred_check
          %p292 = pneg %p114
        $region46: #{tpu_custom_call.1} parent=35 // pred_check_branch
          %294 = sbr.rel (%p292) target = $region48
        $region47: #{tpu_custom_call.1} parent=35 // pred_region
          %295 = dma.done %s288, 128
        $region48: #{tpu_custom_call.1} parent=35 // pred_fallthru
          _
        %s296 = sand.u32 %s127, 1
        %s297 = scalar_lea.sflag [#allocation9], %s296
        %s298 = sand.u32 %s127, 1
        %s299 = smul.addr %s298, 8
        %s300 = scalar_lea.vmem [#allocation8], %s299
        // Predicated region
        $region49: #{tpu_custom_call.1} parent=35 // pred_check
          %p301 = pneg %p140
        $region50: #{tpu_custom_call.1} parent=35 // pred_check_branch
          %303 = sbr.rel (%p301) target = $region52
        $region51: #{tpu_custom_call.1} parent=35 // pred_region
          %304 = dma.done %s297, 128
        $region52: #{tpu_custom_call.1} parent=35 // pred_fallthru
          _
        %s305 = sand.u32 %s49, 1
        %s306 = scalar_lea.sflag [#allocation3], %s305
        %s307 = sand.u32 %s49, 1
        %s308 = smul.addr %s307, 32
        %s309 = scalar_lea.vmem [#allocation2], %s308
        %p310 = pneg %p62
        %p311 = pneg %p59
        %s312 = sand.u32 %s27, 1
        %s313 = scalar_lea.sflag [#allocation6], %s312
        %s314 = sand.u32 %s75, 1
        %s315 = smul.addr %s314, 8
        %s316 = scalar_lea.vmem [#allocation5], %s315
        %p317 = pneg %p88
        %p318 = pneg %p85
        %s319 = sand.u32 %s27, 1
        %s320 = scalar_lea.sflag [#allocation6], %s319
        %s321 = sand.u32 %s101, 1
        %s322 = smul.addr %s321, 8
        %s323 = scalar_lea.vmem [#allocation7], %s322
        %p324 = pneg %p114
        %p325 = pneg %p111
        %s326 = sand.u32 %s127, 1
        %s327 = scalar_lea.sflag [#allocation9], %s326
        %s328 = sand.u32 %s127, 1
        %s329 = smul.addr %s328, 8
        %s330 = scalar_lea.vmem [#allocation8], %s329
        %p331 = pneg %p140
        %p332 = pneg %p137
        %p333 = pneg %p168
        %p334 = pneg %p165
        %s335 = sand.u32 %s155, 1
        %s336 = scalar_lea.sflag [#allocation4], %s335
        %s337 = sand.u32 %s155, 1
        %s338 = smul.addr %s337, 32
        %s339 = scalar_lea.vmem [#allocation10], %s338
        %v340 = vld [vmem:[%s273] sm:$0xff]
        %v341 = vld [vmem:[%s273 + $0x8] sm:$0xff]
        %v342 = vld [vmem:[%s273 + $0x10] sm:$0xff]
        %v343 = vld [vmem:[%s273 + $0x18] sm:$0xff]
        %344 = vrot.lane.b32.xlu0 %v340, 64
        %v345 = vpop.permute.xlu0 %344
        %346 = vrot.lane.b32.xlu0 %v341, 64
        %v347 = vpop.permute.xlu0 %346
        %348 = vrot.lane.b32.xlu0 %v342, 64
        %v349 = vpop.permute.xlu0 %348
        %350 = vrot.lane.b32.xlu0 %v343, 64
        %v351 = vpop.permute.xlu0 %350
        %v352 = vlaneseq
        %v353 = vand.u32 %v352, 127
        %vm354 = vcmp.lt.s32.totalorder %v353, 64
        %v355 = vsel %vm354, %v349, %v351
        %v356 = vsel %vm354, %v347, %v349
        %v357 = vsel %vm354, %v345, %v347
        %v358 = vsel %vm354, %v351, %v345
        %v359 = vld [vmem:[%s282] sm:$0xff]
        %v360 = vld [vmem:[%s291] sm:$0xff]
        %v361 = vld [vmem:[%s300] sm:$0xff]
        %v362 = vmul.f32 %v340, %v359
        %v363 = vmul.f32 %v341, %v359
        %v364 = vmul.f32 %v342, %v359
        %v365 = vmul.f32 %v343, %v359
        %v366 = vmul.f32 %v357, %v360
        %v367 = vmul.f32 %v356, %v360
        %v368 = vmul.f32 %v355, %v360
        %v369 = vmul.f32 %v358, %v360
        %v370 = vadd.f32 %v362, %v366
        %v371 = vadd.f32 %v363, %v367
        %v372 = vadd.f32 %v364, %v368
        %v373 = vadd.f32 %v365, %v369
        %v374 = vmul.f32 %v358, %v361
        %v375 = vmul.f32 %v357, %v361
        %v376 = vmul.f32 %v356, %v361
        %v377 = vmul.f32 %v355, %v361
        %v378 = vadd.f32 %v370, %v374
        %v379 = vadd.f32 %v371, %v375
        %v380 = vadd.f32 %v372, %v376
        %v381 = vadd.f32 %v373, %v377
        %382 = vst [vmem:[%s339] sm:$0xff] %v378
        %383 = vst [vmem:[%s339 + $0x8] sm:$0xff] %v379
        %384 = vst [vmem:[%s339 + $0x10] sm:$0xff] %v380
        %385 = vst [vmem:[%s339 + $0x18] sm:$0xff] %v381
        %s386 = sand.u32 %s155, 1
        %s387 = scalar_lea.sflag [#allocation4], %s386
        %s388 = sand.u32 %s155, 1
        %s389 = smul.addr %s388, 32
        %s390 = scalar_lea.vmem [#allocation10], %s389
        // Predicated region
        $region53: #{tpu_custom_call.1} parent=35 // pred_check
          %p391 = pneg %p165
        $region54: #{tpu_custom_call.1} parent=35 // pred_check_branch
          %393 = sbr.rel (%p391) target = $region56
        $region55: #{tpu_custom_call.1} parent=35 // pred_region
          %s395 = ssub.s32 512, 512
          %396 = vsyncadd %s387, %s395
          %s397 = smul.addr %s31, 4
          %s398 = smul.addr %s32, 8
          %s399 = sadd.s32 %s397, %s398
          %s400 = smul.addr %s399, 128
          %s401 = scalar_lea.hbm %s4, %s400
          %s403 = sshll.u32 %s390, 4
          %s404 = int_to_ptr.vmem [resolvable:$true] %s403
          %406 = dma.vmem_to_hbm [thread:$0]  %s404, 512, %s401, %s387
        $region56: #{tpu_custom_call.1} parent=35 // pred_fallthru
          _
      $region36: #{tpu_custom_call.1} parent=5 // pred_fallthru
        _
      %p407 = scmp.le.s32.totalorder 2, %s22
      // Predicated region
      $region57: #{tpu_custom_call.1} parent=5 // pred_check
        %p408 = pneg %p407
      $region58: #{tpu_custom_call.1} parent=5 // pred_check_branch
        %410 = sbr.rel (%p408) target = $region60
      $region59: #{tpu_custom_call.1} parent=5 // pred_region
        %s411 = ssub.s32 %s22, 2
        // Predicated region
        $region61: #{tpu_custom_call.1} parent=59 // pred_check
          %p412 = pneg %p171
        $region62: #{tpu_custom_call.1} parent=59 // pred_check_branch
          %414 = sbr.rel (%p412) target = $region64
        $region63: #{tpu_custom_call.1} parent=59 // pred_region
          %s415 = sand.u32 %s156, 1
          %s416 = scalar_lea.sflag [#allocation4], %s415
          %s417 = sand.u32 %s156, 1
          %s418 = smul.addr %s417, 32
          %s419 = scalar_lea.vmem [#allocation10], %s418
          %420 = dma.done %s416, 512
        $region64: #{tpu_custom_call.1} parent=59 // pred_fallthru
          _
      $region60: #{tpu_custom_call.1} parent=5 // pred_fallthru
        _
    $region6: #{tpu_custom_call.1} parent=1 // loop_footer
      %s26 = sadd.s32 1, %s22
    $region7: #{tpu_custom_call.1} parent=1 // loop_footer_branch
      %21 = sbr.rel target = $region3
    $region8: #{tpu_custom_call.1} parent=1 // loop_exit
      _
    %421 = vsyncpa [#allocation3], 1
    %s422 = scalar_lea.sflag [#allocation3], 1
    %423 = vsyncpa %s422, 1
    %424 = vsyncpa [#allocation6], 1
    %s425 = scalar_lea.sflag [#allocation6], 1
    %426 = vsyncpa %s425, 1
    %427 = vsyncpa [#allocation9], 1
    %s428 = scalar_lea.sflag [#allocation9], 1
    %429 = vsyncpa %s428, 1
    %430 = vsyncpa [#allocation4], 1
    %s431 = scalar_lea.sflag [#allocation4], 1
    %432 = vsyncpa %s431, 1

</llo_original>
